<compile_context>
chip_gen: v5e
topology: v5e:2x2
jax: 0.10.0
libtpu: 0.0.40
codegen_flags: <defaults>
</compile_context>

<pallas_src>
import jax
import jax.numpy as jnp
from jax.experimental import pallas as pl
from jax.experimental.pallas import tpu as pltpu


def _make_kernel(block_b):
    def add_conv1x1_kernel(a_ref, b_ref, w_ref, o_ref):
        # a_ref, b_ref: (block_b, C_in, HW); w_ref: (C_out, C_in)
        # o_ref: (block_b, C_out, HW) float32
        w = w_ref[...]
        for bi in range(block_b):  # static, unrolled at trace time
            # Add in f32 (cheap even for bf16 inputs; v5e has no bf16 VALU),
            # then match the weight dtype so the MXU sees a uniform pair.
            x = (a_ref[bi].astype(jnp.float32)
                 + b_ref[bi].astype(jnp.float32)).astype(w.dtype)
            o_ref[bi] = jnp.dot(w, x, preferred_element_type=jnp.float32)

    return add_conv1x1_kernel


def add_conv1x1(x54, x40, weight, *, block_b=None, activation_dtype=None):
    """x54, x40: (N, C_in, H, W); weight: (C_out, C_in, 1, 1).

    Returns (N, C_out, H, W) float32, matching torch's conv2d19(x54 + x40)
    (1x1 stride-1 bias-free conv).  Set activation_dtype=jnp.bfloat16 to halve
    HBM input traffic if accuracy tolerance allows (accumulation stays f32).
    """
    n, c_in, h, w = x54.shape
    c_out = weight.shape[0]
    hw = h * w

    if activation_dtype is not None:
        x54 = x54.astype(activation_dtype)
        x40 = x40.astype(activation_dtype)

    # Free reshapes: NCHW is already channel-major, no transposes needed.
    a = x54.reshape(n, c_in, hw)
    b = x40.reshape(n, c_in, hw)
    wt = weight.reshape(c_out, c_in)
    if activation_dtype is not None:
        wt = wt.astype(activation_dtype)

    # Pack several images per grid step to amortize per-step overhead when
    # the batch grows; with N=1 this is a single step over the whole problem.
    if block_b is None:
        block_b = min(n, 8)
    grid = (pl.cdiv(n, block_b),)

    in_itemsize = jnp.dtype(a.dtype).itemsize
    cost = pl.CostEstimate(
        flops=2 * n * c_out * c_in * hw,
        transcendentals=0,
        bytes_accessed=(in_itemsize * (2 * n * c_in * hw + c_out * c_in)
                        + 4 * n * c_out * hw),
    )

    out = pl.pallas_call(
        _make_kernel(block_b),
        out_shape=jax.ShapeDtypeStruct((n, c_out, hw), jnp.float32),
        grid=grid,
        in_specs=[
            # Last two dims are the full array extents -> (8,128) rule is met;
            # HW=784 stays unpadded (padding would only add HBM traffic).
            pl.BlockSpec((block_b, c_in, hw), lambda i: (i, 0, 0)),
            pl.BlockSpec((block_b, c_in, hw), lambda i: (i, 0, 0)),
            # Constant block index -> weight stays resident in VMEM.
            pl.BlockSpec((c_out, c_in), lambda i: (0, 0)),
        ],
        out_specs=pl.BlockSpec((block_b, c_out, hw), lambda i: (i, 0, 0)),
        compiler_params=pltpu.CompilerParams(
            dimension_semantics=("parallel",)  # no cross-step dependence
        ),
        cost_estimate=cost,
    )(a, b, wt)

    return out.reshape(n, c_out, h, w)

# TODO(synk): for end-to-end perf this add+1x1-conv should be fused with its
# producer/consumer ops inside one pallas_call / jit region; here only the two
# ops of module M exist, so the fusion boundary matches the module.


if __name__ == "__main__":
    key = jax.random.PRNGKey(0)
    k1, k2, k3 = jax.random.split(key, 3)

    # Shapes implied by the module's forward: (1, 40, 28, 28)
    x54 = jax.random.normal(k1, (1, 40, 28, 28), dtype=jnp.float32)
    x40 = jax.random.normal(k2, (1, 40, 28, 28), dtype=jnp.float32)
    # Deterministic synthetic weights for Conv2d(40, 120, 1x1, bias=False)
    weight = jax.random.normal(k3, (120, 40, 1, 1), dtype=jnp.float32) * 0.1

    y = add_conv1x1(x54, x40, weight)
    y = jax.block_until_ready(y)

    # Pure-JAX reference for sanity
    x = x54 + x40
    ref = jnp.einsum("nchw,oc->nohw", x, weight.reshape(120, 40))
    assert y.shape == (1, 120, 28, 28)
    assert jnp.allclose(y, ref, atol=1e-4, rtol=1e-4)

    print("KERNEL_OK")
</pallas_src>

<mosaic_0001>
module attributes {stable_mosaic.version = 11 : i64} {
  func.func @add_conv1x1_kernel(%arg0: i32, %arg1: memref<1x40x784xf32, #tpu.memory_space<vmem>>, %arg2: memref<1x40x784xf32, #tpu.memory_space<vmem>>, %arg3: memref<120x40xf32, #tpu.memory_space<vmem>>, %arg4: memref<1x120x784xf32, #tpu.memory_space<vmem>>) attributes {dimension_semantics = [#tpu.dimension_semantics<parallel>], iteration_bounds = array<i64: 1>, scalar_prefetch = 0 : i64, scratch_operands = 0 : i64, tpu.core_type = #tpu.core_type<tc>, window_params = [{transform_indices = @transform_0, window_bounds = array<i64: 1, 40, 784>}, {transform_indices = @transform_1, window_bounds = array<i64: 1, 40, 784>}, {pipeline_mode = #tpu.pipeline_mode<synchronous>, transform_indices = @transform_2, window_bounds = array<i64: 120, 40>}, {transform_indices = @transform_3, window_bounds = array<i64: 1, 120, 784>}]} {
    %c0 = arith.constant 0 : index
    %c0_0 = arith.constant 0 : index
    %0 = vector.load %arg3[%c0, %c0_0] : memref<120x40xf32, #tpu.memory_space<vmem>>, vector<120x40xf32>
    %c0_1 = arith.constant 0 : index
    %c0_2 = arith.constant 0 : index
    %c0_3 = arith.constant 0 : index
    %1 = vector.load %arg1[%c0_1, %c0_2, %c0_3] : memref<1x40x784xf32, #tpu.memory_space<vmem>>, vector<1x40x784xf32>
    %2 = vector.shape_cast %1 : vector<1x40x784xf32> to vector<40x784xf32>
    %c0_4 = arith.constant 0 : index
    %c0_5 = arith.constant 0 : index
    %c0_6 = arith.constant 0 : index
    %3 = vector.load %arg2[%c0_4, %c0_5, %c0_6] : memref<1x40x784xf32, #tpu.memory_space<vmem>>, vector<1x40x784xf32>
    %4 = vector.shape_cast %3 : vector<1x40x784xf32> to vector<40x784xf32>
    %5 = arith.addf %2, %4 : vector<40x784xf32>
    %cst = arith.constant dense<0.000000e+00> : vector<120x784xf32>
    %6 = tpu.matmul %0, %5, %cst {dimension_numbers = #tpu.dot_dimension_numbers<[1], [0], [0], [1], [0, 0, 1, 1], [], []>} : vector<120x40xf32>, vector<40x784xf32>, vector<120x784xf32> -> vector<120x784xf32>
    %c0_7 = arith.constant 0 : index
    %c0_8 = arith.constant 0 : index
    %c0_9 = arith.constant 0 : index
    %7 = vector.load %arg4[%c0_7, %c0_8, %c0_9] : memref<1x120x784xf32, #tpu.memory_space<vmem>>, vector<1x120x784xf32>
    %8 = vector.shape_cast %7 : vector<1x120x784xf32> to vector<120x784xf32>
    %9 = vector.shape_cast %6 : vector<120x784xf32> to vector<1x120x784xf32>
    tpu.vector_store %arg4[%c0_7, %c0_8, %c0_9], %9 {strides = array<i32>} : memref<1x120x784xf32, #tpu.memory_space<vmem>>, vector<1x120x784xf32>,
    return
  }
  func.func @transform_0(%arg0: i32) -> (i32, i32, i32) {
    %c0_i32 = arith.constant 0 : i32
    %c0_i32_0 = arith.constant 0 : i32
    %c0_i32_1 = arith.constant 0 : i32
    return %arg0, %c0_i32, %c0_i32_0 : i32, i32, i32
  }
  func.func @transform_1(%arg0: i32) -> (i32, i32, i32) {
    %c0_i32 = arith.constant 0 : i32
    %c0_i32_0 = arith.constant 0 : i32
    %c0_i32_1 = arith.constant 0 : i32
    return %arg0, %c0_i32, %c0_i32_0 : i32, i32, i32
  }
  func.func @transform_2(%arg0: i32) -> (i32, i32) {
    %c0_i32 = arith.constant 0 : i32
    %c0_i32_0 = arith.constant 0 : i32
    %c0_i32_1 = arith.constant 0 : i32
    return %c0_i32, %c0_i32_0 : i32, i32
  }
  func.func @transform_3(%arg0: i32) -> (i32, i32, i32) {
    %c0_i32 = arith.constant 0 : i32
    %c0_i32_0 = arith.constant 0 : i32
    %c0_i32_1 = arith.constant 0 : i32
    return %arg0, %c0_i32, %c0_i32_0 : i32, i32, i32
  }
}

</mosaic_0001>

<llo_original>
// kernel: tpu_custom_call.1
$region0: #{tpu_custom_call.1}
  #allocation0 [shape = 'u32[]', space=smem, size = 0x4, offset = 0x4, fixed_abs, tag = 'smem constant byte address 0x4 - core index']
  #allocation1 [shape = 'u32[72,128]{1,0:T(1,128)}', space=vmem, size = 0x9000, scoped, tag = 'internal scratch']
  %s0 = inlined_call_operand.hbm [shape: f32[1,40,784], index: 0, kind: input, shape index: {}]
  %s1 = inlined_call_operand.hbm [shape: f32[1,40,784], index: 1, kind: input, shape index: {}]
  %s2 = inlined_call_operand.vmem [shape: f32[120,40], index: 2, kind: input, shape index: {}]
  %s3 = inlined_call_operand.vmem [shape: f32[1,120,784], index: 3, kind: output, shape index: {}]
  %s4 = sld [smem:[#allocation0]]
  $region30: #{tpu_custom_call.1} parent=0
    _
  %s6 = ssub.s32 1, %s4
  %s7 = scalar_select 0, %s6, %s4
  $region1: #{tpu_custom_call.1} parent=0
    #allocation2 [shape = 'u8[143360]{0}', space=vmem, size = 0x23000, scoped, tag = 'input window, operand 0, single buffered']
    #allocation3 [shape = 's32[1]{0}', space=sflag, size = 0x4, scoped, tag = 'scoped memory for tpu_custom_call.1']
    #allocation4 [shape = 'u8[143360]{0}', space=vmem, size = 0x23000, scoped, tag = 'input window, operand 1, single buffered']
    #allocation5 [shape = 's32[1]{0}', space=sflag, size = 0x4, scoped, tag = 'scoped memory for tpu_custom_call.1']
    %8 = vsyncpa [#allocation3], 0
    %9 = vsyncpa [#allocation5], 0
    // Predicated region
    $region2: #{tpu_custom_call.1} parent=1 // pred_check
      _
    $region3: #{tpu_custom_call.1} parent=1 // pred_check_branch
      %11 = sbr.rel (0) target = $region5
    $region4: #{tpu_custom_call.1} parent=1 // pred_region
      %13 = vsyncadd [#allocation3], 0
      %s14 = sshll.u32 %s0, 4
      %s15 = int_to_ptr.hbm [resolvable:$true] %s14
      %s16 = sshll.u32 [#allocation2], 4
      %s17 = int_to_ptr.vmem [resolvable:$true] %s16
      %22 = dma.hbm_to_vmem [thread:$0]  %s15, 4480, %s17, [#allocation3], 896, 896, 56
    $region5: #{tpu_custom_call.1} parent=1 // pred_fallthru
      _
    // Predicated region
    $region6: #{tpu_custom_call.1} parent=1 // pred_check
      _
    $region7: #{tpu_custom_call.1} parent=1 // pred_check_branch
      %24 = sbr.rel (0) target = $region9
    $region8: #{tpu_custom_call.1} parent=1 // pred_region
      %26 = vsyncadd [#allocation5], 0
      %s27 = sshll.u32 %s1, 4
      %s28 = int_to_ptr.hbm [resolvable:$true] %s27
      %s29 = sshll.u32 [#allocation4], 4
      %s30 = int_to_ptr.vmem [resolvable:$true] %s29
      %35 = dma.hbm_to_vmem [thread:$0]  %s28, 4480, %s30, [#allocation5], 896, 896, 56
    $region9: #{tpu_custom_call.1} parent=1 // pred_fallthru
      _
    // Predicated region
    $region10: #{tpu_custom_call.1} parent=1 // pred_check
      _
    $region11: #{tpu_custom_call.1} parent=1 // pred_check_branch
      %37 = sbr.rel (0) target = $region13
    $region12: #{tpu_custom_call.1} parent=1 // pred_region
      _
    $region13: #{tpu_custom_call.1} parent=1 // pred_fallthru
      _
    // Predicated region
    $region14: #{tpu_custom_call.1} parent=1 // pred_check
      _
    $region15: #{tpu_custom_call.1} parent=1 // pred_check_branch
      %39 = sbr.rel (0) target = $region17
    $region16: #{tpu_custom_call.1} parent=1 // pred_region
      %41 = dma.done [#allocation3], 4480
    $region17: #{tpu_custom_call.1} parent=1 // pred_fallthru
      _
    // Predicated region
    $region18: #{tpu_custom_call.1} parent=1 // pred_check
      _
    $region19: #{tpu_custom_call.1} parent=1 // pred_check_branch
      %43 = sbr.rel (0) target = $region21
    $region20: #{tpu_custom_call.1} parent=1 // pred_region
      %45 = dma.done [#allocation5], 4480
    $region21: #{tpu_custom_call.1} parent=1 // pred_fallthru
      _
    %v46 = vld [vmem:[%s2] sm:$0xff]
    %v47 = vld [vmem:[%s2 + $0x8] sm:$0xff]
    %v48 = vld [vmem:[%s2 + $0x10] sm:$0xff]
    %v49 = vld [vmem:[%s2 + $0x18] sm:$0xff]
    %v50 = vld [vmem:[%s2 + $0x20] sm:$0xff]
    %v51 = vld [vmem:[%s2 + $0x28] sm:$0xff]
    %v52 = vld [vmem:[%s2 + $0x30] sm:$0xff]
    %v53 = vld [vmem:[%s2 + $0x38] sm:$0xff]
    %v54 = vld [vmem:[%s2 + $0x40] sm:$0xff]
    %v55 = vld [vmem:[%s2 + $0x48] sm:$0xff]
    %v56 = vld [vmem:[%s2 + $0x50] sm:$0xff]
    %v57 = vld [vmem:[%s2 + $0x58] sm:$0xff]
    %v58 = vld [vmem:[%s2 + $0x60] sm:$0xff]
    %v59 = vld [vmem:[%s2 + $0x68] sm:$0xff]
    %v60 = vld [vmem:[%s2 + $0x70] sm:$0xff]
    %v61 = vld [vmem:[#allocation2] sm:$0xff]
    %v62 = vld [vmem:[#allocation2 + $0x8] sm:$0xff]
    %v63 = vld [vmem:[#allocation2 + $0x10] sm:$0xff]
    %v64 = vld [vmem:[#allocation2 + $0x18] sm:$0xff]
    %v65 = vld [vmem:[#allocation2 + $0x20] sm:$0xff]
    %v66 = vld [vmem:[#allocation2 + $0x28] sm:$0xff]
    %v67 = vld [vmem:[#allocation2 + $0x30] sm:$0xff]
    %v68 = vld [vmem:[#allocation2 + $0x38] sm:$0xff]
    %v69 = vld [vmem:[#allocation2 + $0x40] sm:$0xff]
    %v70 = vld [vmem:[#allocation2 + $0x48] sm:$0xff]
    %v71 = vld [vmem:[#allocation2 + $0x50] sm:$0xff]
    %v72 = vld [vmem:[#allocation2 + $0x58] sm:$0xff]
    %v73 = vld [vmem:[#allocation2 + $0x60] sm:$0xff]
    %v74 = vld [vmem:[#allocation2 + $0x68] sm:$0xff]
    %v75 = vld [vmem:[#allocation2 + $0x70] sm:$0xff]
    %v76 = vld [vmem:[#allocation2 + $0x78] sm:$0xff]
    %v77 = vld [vmem:[#allocation2 + $0x80] sm:$0xff]
    %v78 = vld [vmem:[#allocation2 + $0x88] sm:$0xff]
    %v79 = vld [vmem:[#allocation2 + $0x90] sm:$0xff]
    %v80 = vld [vmem:[#allocation2 + $0x98] sm:$0xff]
    %v81 = vld [vmem:[#allocation2 + $0xa0] sm:$0xff]
    %v82 = vld [vmem:[#allocation2 + $0xa8] sm:$0xff]
    %v83 = vld [vmem:[#allocation2 + $0xb0] sm:$0xff]
    %v84 = vld [vmem:[#allocation2 + $0xb8] sm:$0xff]
    %v85 = vld [vmem:[#allocation2 + $0xc0] sm:$0xff]
    %v86 = vld [vmem:[#allocation2 + $0xc8] sm:$0xff]
    %v87 = vld [vmem:[#allocation2 + $0xd0] sm:$0xff]
    %v88 = vld [vmem:[#allocation2 + $0xd8] sm:$0xff]
    %v89 = vld [vmem:[#allocation2 + $0xe0] sm:$0xff]
    %v90 = vld [vmem:[#allocation2 + $0xe8] sm:$0xff]
    %v91 = vld [vmem:[#allocation2 + $0xf0] sm:$0xff]
    %v92 = vld [vmem:[#allocation2 + $0xf8] sm:$0xff]
    %v93 = vld [vmem:[#allocation2 + $0x100] sm:$0xff]
    %v94 = vld [vmem:[#allocation2 + $0x108] sm:$0xff]
    %v95 = vld [vmem:[#allocation2 + $0x110] sm:$0xff]
    %v96 = vld [vmem:[#allocation4] sm:$0xff]
    %v97 = vld [vmem:[#allocation4 + $0x8] sm:$0xff]
    %v98 = vld [vmem:[#allocation4 + $0x10] sm:$0xff]
    %v99 = vld [vmem:[#allocation4 + $0x18] sm:$0xff]
    %v100 = vld [vmem:[#allocation4 + $0x20] sm:$0xff]
    %v101 = vld [vmem:[#allocation4 + $0x28] sm:$0xff]
    %v102 = vld [vmem:[#allocation4 + $0x30] sm:$0xff]
    %v103 = vld [vmem:[#allocation4 + $0x38] sm:$0xff]
    %v104 = vld [vmem:[#allocation4 + $0x40] sm:$0xff]
    %v105 = vld [vmem:[#allocation4 + $0x48] sm:$0xff]
    %v106 = vld [vmem:[#allocation4 + $0x50] sm:$0xff]
    %v107 = vld [vmem:[#allocation4 + $0x58] sm:$0xff]
    %v108 = vld [vmem:[#allocation4 + $0x60] sm:$0xff]
    %v109 = vld [vmem:[#allocation4 + $0x68] sm:$0xff]
    %v110 = vld [vmem:[#allocation4 + $0x70] sm:$0xff]
    %v111 = vld [vmem:[#allocation4 + $0x78] sm:$0xff]
    %v112 = vld [vmem:[#allocation4 + $0x80] sm:$0xff]
    %v113 = vld [vmem:[#allocation4 + $0x88] sm:$0xff]
    %v114 = vld [vmem:[#allocation4 + $0x90] sm:$0xff]
    %v115 = vld [vmem:[#allocation4 + $0x98] sm:$0xff]
    %v116 = vld [vmem:[#allocation4 + $0xa0] sm:$0xff]
    %v117 = vld [vmem:[#allocation4 + $0xa8] sm:$0xff]
    %v118 = vld [vmem:[#allocation4 + $0xb0] sm:$0xff]
    %v119 = vld [vmem:[#allocation4 + $0xb8] sm:$0xff]
    %v120 = vld [vmem:[#allocation4 + $0xc0] sm:$0xff]
    %v121 = vld [vmem:[#allocation4 + $0xc8] sm:$0xff]
    %v122 = vld [vmem:[#allocation4 + $0xd0] sm:$0xff]
    %v123 = vld [vmem:[#allocation4 + $0xd8] sm:$0xff]
    %v124 = vld [vmem:[#allocation4 + $0xe0] sm:$0xff]
    %v125 = vld [vmem:[#allocation4 + $0xe8] sm:$0xff]
    %v126 = vld [vmem:[#allocation4 + $0xf0] sm:$0xff]
    %v127 = vld [vmem:[#allocation4 + $0xf8] sm:$0xff]
    %v128 = vld [vmem:[#allocation4 + $0x100] sm:$0xff]
    %v129 = vld [vmem:[#allocation4 + $0x108] sm:$0xff]
    %v130 = vld [vmem:[#allocation4 + $0x110] sm:$0xff]
    %v131 = vadd.f32 %v61, %v96
    %v132 = vadd.f32 %v62, %v97
    %v133 = vadd.f32 %v63, %v98
    %v134 = vadd.f32 %v64, %v99
    %v135 = vadd.f32 %v65, %v100
    %v136 = vadd.f32 %v66, %v101
    %v137 = vadd.f32 %v67, %v102
    %v138 = vadd.f32 %v68, %v103
    %v139 = vadd.f32 %v69, %v104
    %v140 = vadd.f32 %v70, %v105
    %v141 = vadd.f32 %v71, %v106
    %v142 = vadd.f32 %v72, %v107
    %v143 = vadd.f32 %v73, %v108
    %v144 = vadd.f32 %v74, %v109
    %v145 = vadd.f32 %v75, %v110
    %v146 = vadd.f32 %v76, %v111
    %v147 = vadd.f32 %v77, %v112
    %v148 = vadd.f32 %v78, %v113
    %v149 = vadd.f32 %v79, %v114
    %v150 = vadd.f32 %v80, %v115
    %v151 = vadd.f32 %v81, %v116
    %v152 = vadd.f32 %v82, %v117
    %v153 = vadd.f32 %v83, %v118
    %v154 = vadd.f32 %v84, %v119
    %v155 = vadd.f32 %v85, %v120
    %v156 = vadd.f32 %v86, %v121
    %v157 = vadd.f32 %v87, %v122
    %v158 = vadd.f32 %v88, %v123
    %v159 = vadd.f32 %v89, %v124
    %v160 = vadd.f32 %v90, %v125
    %v161 = vadd.f32 %v91, %v126
    %v162 = vadd.f32 %v92, %v127
    %v163 = vadd.f32 %v93, %v128
    %v164 = vadd.f32 %v94, %v129
    %v165 = vadd.f32 %v95, %v130
    %vm166 = vcmask 326656
    %v168 = vsel %vm166, %v46, 0
    %v171 = vsel %vm166, %v47, 0
    %v174 = vsel %vm166, %v48, 0
    %v177 = vsel %vm166, %v49, 0
    %v180 = vsel %vm166, %v50, 0
    %v183 = vsel %vm166, %v51, 0
    %v186 = vsel %vm166, %v52, 0
    %v189 = vsel %vm166, %v53, 0
    %v192 = vsel %vm166, %v54, 0
    %v195 = vsel %vm166, %v55, 0
    %v198 = vsel %vm166, %v56, 0
    %v201 = vsel %vm166, %v57, 0
    %v204 = vsel %vm166, %v58, 0
    %v207 = vsel %vm166, %v59, 0
    %v210 = vsel %vm166, %v60, 0
    %212 = vmatpush.msra.mxu0 0.0
    %213 = vmatpush.msra.mxu0 0.0
    %214 = vmatpush.msra.mxu0 0.0
    %215 = vmatpush.msra.mxu0 0.0
    %216 = vmatpush.msra.mxu0 0.0
    %217 = vmatpush.msra.mxu0 0.0
    %218 = vmatpush.msra.mxu0 0.0
    %219 = vmatpush.msra.mxu0 0.0
    %220 = vmatpush.msra.mxu0 0.0
    %221 = vmatpush.msra.mxu0 0.0
    %222 = vmatpush.msra.mxu0 0.0
    %223 = vmatpush.msra.mxu0 %v159
    %224 = vmatpush.msra.mxu0 %v152
    %225 = vmatpush.msra.mxu0 %v145
    %226 = vmatpush.msra.mxu0 %v138
    %227 = vmatpush.msra.mxu0 %v131
    %228 = vmatmul.f32.gmra.mxu0 %v168
    %v229 = vpop.f32.mrf.mxu0
    %v230 = vadd.f32 0.0, %v229
    %231 = vmatmul.f32.gmra.mxu0 %v171
    %v232 = vpop.f32.mrf.mxu0
    %v233 = vadd.f32 0.0, %v232
    %234 = vmatmul.f32.gmra.mxu0 %v174
    %v235 = vpop.f32.mrf.mxu0
    %v236 = vadd.f32 0.0, %v235
    %237 = vmatmul.f32.gmra.mxu0 %v177
    %v238 = vpop.f32.mrf.mxu0
    %v239 = vadd.f32 0.0, %v238
    %240 = vmatmul.f32.gmra.mxu0 %v180
    %v241 = vpop.f32.mrf.mxu0
    %v242 = vadd.f32 0.0, %v241
    %243 = vmatmul.f32.gmra.mxu0 %v183
    %v244 = vpop.f32.mrf.mxu0
    %v245 = vadd.f32 0.0, %v244
    %246 = vmatmul.f32.gmra.mxu0 %v186
    %v247 = vpop.f32.mrf.mxu0
    %v248 = vadd.f32 0.0, %v247
    %249 = vmatmul.f32.gmra.mxu0 %v189
    %v250 = vpop.f32.mrf.mxu0
    %v251 = vadd.f32 0.0, %v250
    %252 = vmatmul.f32.gmra.mxu0 %v192
    %v253 = vpop.f32.mrf.mxu0
    %v254 = vadd.f32 0.0, %v253
    %255 = vmatmul.f32.gmra.mxu0 %v195
    %v256 = vpop.f32.mrf.mxu0
    %v257 = vadd.f32 0.0, %v256
    %258 = vmatmul.f32.gmra.mxu0 %v198
    %v259 = vpop.f32.mrf.mxu0
    %v260 = vadd.f32 0.0, %v259
    %261 = vmatmul.f32.gmra.mxu0 %v201
    %v262 = vpop.f32.mrf.mxu0
    %v263 = vadd.f32 0.0, %v262
    %264 = vmatmul.f32.gmra.mxu0 %v204
    %v265 = vpop.f32.mrf.mxu0
    %v266 = vadd.f32 0.0, %v265
    %267 = vmatmul.f32.gmra.mxu0 %v207
    %v268 = vpop.f32.mrf.mxu0
    %v269 = vadd.f32 0.0, %v268
    %270 = vmatmul.f32.gmra.mxu0 %v210
    %v271 = vpop.f32.mrf.mxu0
    %v272 = vadd.f32 0.0, %v271
    %273 = vdwg.mxu0
    %274 = vmatpush.msra.mxu0 0.0
    %275 = vmatpush.msra.mxu0 0.0
    %276 = vmatpush.msra.mxu0 0.0
    %277 = vmatpush.msra.mxu0 0.0
    %278 = vmatpush.msra.mxu0 0.0
    %279 = vmatpush.msra.mxu0 0.0
    %280 = vmatpush.msra.mxu0 0.0
    %281 = vmatpush.msra.mxu0 0.0
    %282 = vmatpush.msra.mxu0 0.0
    %283 = vmatpush.msra.mxu0 0.0
    %284 = vmatpush.msra.mxu0 0.0
    %285 = vmatpush.msra.mxu0 %v160
    %286 = vmatpush.msra.mxu0 %v153
    %287 = vmatpush.msra.mxu0 %v146
    %288 = vmatpush.msra.mxu0 %v139
    %289 = vmatpush.msra.mxu0 %v132
    %290 = vmatmul.f32.gmra.mxu0 %v168
    %v291 = vpop.f32.mrf.mxu0
    %v292 = vadd.f32 0.0, %v291
    %293 = vmatmul.f32.gmra.mxu0 %v171
    %v294 = vpop.f32.mrf.mxu0
    %v295 = vadd.f32 0.0, %v294
    %296 = vmatmul.f32.gmra.mxu0 %v174
    %v297 = vpop.f32.mrf.mxu0
    %v298 = vadd.f32 0.0, %v297
    %299 = vmatmul.f32.gmra.mxu0 %v177
    %v300 = vpop.f32.mrf.mxu0
    %v301 = vadd.f32 0.0, %v300
    %302 = vmatmul.f32.gmra.mxu0 %v180
    %v303 = vpop.f32.mrf.mxu0
    %v304 = vadd.f32 0.0, %v303
    %305 = vmatmul.f32.gmra.mxu0 %v183
    %v306 = vpop.f32.mrf.mxu0
    %v307 = vadd.f32 0.0, %v306
    %308 = vmatmul.f32.gmra.mxu0 %v186
    %v309 = vpop.f32.mrf.mxu0
    %v310 = vadd.f32 0.0, %v309
    %311 = vmatmul.f32.gmra.mxu0 %v189
    %v312 = vpop.f32.mrf.mxu0
    %v313 = vadd.f32 0.0, %v312
    %314 = vmatmul.f32.gmra.mxu0 %v192
    %v315 = vpop.f32.mrf.mxu0
    %v316 = vadd.f32 0.0, %v315
    %317 = vmatmul.f32.gmra.mxu0 %v195
    %v318 = vpop.f32.mrf.mxu0
    %v319 = vadd.f32 0.0, %v318
    %320 = vmatmul.f32.gmra.mxu0 %v198
    %v321 = vpop.f32.mrf.mxu0
    %v322 = vadd.f32 0.0, %v321
    %323 = vmatmul.f32.gmra.mxu0 %v201
    %v324 = vpop.f32.mrf.mxu0
    %v325 = vadd.f32 0.0, %v324
    %326 = vmatmul.f32.gmra.mxu0 %v204
    %v327 = vpop.f32.mrf.mxu0
    %v328 = vadd.f32 0.0, %v327
    %329 = vmatmul.f32.gmra.mxu0 %v207
    %v330 = vpop.f32.mrf.mxu0
    %v331 = vadd.f32 0.0, %v330
    %332 = vmatmul.f32.gmra.mxu0 %v210
    %v333 = vpop.f32.mrf.mxu0
    %v334 = vadd.f32 0.0, %v333
    %335 = vdwg.mxu0
    %336 = vmatpush.msra.mxu0 0.0
    %337 = vmatpush.msra.mxu0 0.0
    %338 = vmatpush.msra.mxu0 0.0
    %339 = vmatpush.msra.mxu0 0.0
    %340 = vmatpush.msra.mxu0 0.0
    %341 = vmatpush.msra.mxu0 0.0
    %342 = vmatpush.msra.mxu0 0.0
    %343 = vmatpush.msra.mxu0 0.0
    %344 = vmatpush.msra.mxu0 0.0
    %345 = vmatpush.msra.mxu0 0.0
    %346 = vmatpush.msra.mxu0 0.0
    %347 = vmatpush.msra.mxu0 %v161
    %348 = vmatpush.msra.mxu0 %v154
    %349 = vmatpush.msra.mxu0 %v147
    %350 = vmatpush.msra.mxu0 %v140
    %351 = vmatpush.msra.mxu0 %v133
    %352 = vmatmul.f32.gmra.mxu0 %v168
    %v353 = vpop.f32.mrf.mxu0
    %v354 = vadd.f32 0.0, %v353
    %355 = vmatmul.f32.gmra.mxu0 %v171
    %v356 = vpop.f32.mrf.mxu0
    %v357 = vadd.f32 0.0, %v356
    %358 = vmatmul.f32.gmra.mxu0 %v174
    %v359 = vpop.f32.mrf.mxu0
    %v360 = vadd.f32 0.0, %v359
    %361 = vmatmul.f32.gmra.mxu0 %v177
    %v362 = vpop.f32.mrf.mxu0
    %v363 = vadd.f32 0.0, %v362
    %364 = vmatmul.f32.gmra.mxu0 %v180
    %v365 = vpop.f32.mrf.mxu0
    %v366 = vadd.f32 0.0, %v365
    %367 = vmatmul.f32.gmra.mxu0 %v183
    %v368 = vpop.f32.mrf.mxu0
    %v369 = vadd.f32 0.0, %v368
    %370 = vmatmul.f32.gmra.mxu0 %v186
    %v371 = vpop.f32.mrf.mxu0
    %v372 = vadd.f32 0.0, %v371
    %373 = vmatmul.f32.gmra.mxu0 %v189
    %v374 = vpop.f32.mrf.mxu0
    %v375 = vadd.f32 0.0, %v374
    %376 = vmatmul.f32.gmra.mxu0 %v192
    %v377 = vpop.f32.mrf.mxu0
    %v378 = vadd.f32 0.0, %v377
    %379 = vmatmul.f32.gmra.mxu0 %v195
    %v380 = vpop.f32.mrf.mxu0
    %v381 = vadd.f32 0.0, %v380
    %382 = vmatmul.f32.gmra.mxu0 %v198
    %v383 = vpop.f32.mrf.mxu0
    %v384 = vadd.f32 0.0, %v383
    %385 = vmatmul.f32.gmra.mxu0 %v201
    %v386 = vpop.f32.mrf.mxu0
    %v387 = vadd.f32 0.0, %v386
    %388 = vmatmul.f32.gmra.mxu0 %v204
    %v389 = vpop.f32.mrf.mxu0
    %v390 = vadd.f32 0.0, %v389
    %391 = vmatmul.f32.gmra.mxu0 %v207
    %v392 = vpop.f32.mrf.mxu0
    %v393 = vadd.f32 0.0, %v392
    %394 = vmatmul.f32.gmra.mxu0 %v210
    %v395 = vpop.f32.mrf.mxu0
    %v396 = vadd.f32 0.0, %v395
    %397 = vdwg.mxu0
    %398 = vmatpush.msra.mxu0 0.0
    %399 = vmatpush.msra.mxu0 0.0
    %400 = vmatpush.msra.mxu0 0.0
    %401 = vmatpush.msra.mxu0 0.0
    %402 = vmatpush.msra.mxu0 0.0
    %403 = vmatpush.msra.mxu0 0.0
    %404 = vmatpush.msra.mxu0 0.0
    %405 = vmatpush.msra.mxu0 0.0
    %406 = vmatpush.msra.mxu0 0.0
    %407 = vmatpush.msra.mxu0 0.0
    %408 = vmatpush.msra.mxu0 0.0
    %409 = vmatpush.msra.mxu0 %v162
    %410 = vmatpush.msra.mxu0 %v155
    %411 = vmatpush.msra.mxu0 %v148
    %412 = vmatpush.msra.mxu0 %v141
    %413 = vmatpush.msra.mxu0 %v134
    %414 = vmatmul.f32.gmra.mxu0 %v168
    %v415 = vpop.f32.mrf.mxu0
    %v416 = vadd.f32 0.0, %v415
    %417 = vmatmul.f32.gmra.mxu0 %v171
    %v418 = vpop.f32.mrf.mxu0
    %v419 = vadd.f32 0.0, %v418
    %420 = vmatmul.f32.gmra.mxu0 %v174
    %v421 = vpop.f32.mrf.mxu0
    %v422 = vadd.f32 0.0, %v421
    %423 = vmatmul.f32.gmra.mxu0 %v177
    %v424 = vpop.f32.mrf.mxu0
    %v425 = vadd.f32 0.0, %v424
    %426 = vmatmul.f32.gmra.mxu0 %v180
    %v427 = vpop.f32.mrf.mxu0
    %v428 = vadd.f32 0.0, %v427
    %429 = vmatmul.f32.gmra.mxu0 %v183
    %v430 = vpop.f32.mrf.mxu0
    %v431 = vadd.f32 0.0, %v430
    %432 = vmatmul.f32.gmra.mxu0 %v186
    %v433 = vpop.f32.mrf.mxu0
    %v434 = vadd.f32 0.0, %v433
    %435 = vmatmul.f32.gmra.mxu0 %v189
    %v436 = vpop.f32.mrf.mxu0
    %v437 = vadd.f32 0.0, %v436
    %438 = vmatmul.f32.gmra.mxu0 %v192
    %v439 = vpop.f32.mrf.mxu0
    %v440 = vadd.f32 0.0, %v439
    %441 = vmatmul.f32.gmra.mxu0 %v195
    %v442 = vpop.f32.mrf.mxu0
    %v443 = vadd.f32 0.0, %v442
    %444 = vmatmul.f32.gmra.mxu0 %v198
    %v445 = vpop.f32.mrf.mxu0
    %v446 = vadd.f32 0.0, %v445
    %447 = vmatmul.f32.gmra.mxu0 %v201
    %v448 = vpop.f32.mrf.mxu0
    %v449 = vadd.f32 0.0, %v448
    %450 = vmatmul.f32.gmra.mxu0 %v204
    %v451 = vpop.f32.mrf.mxu0
    %v452 = vadd.f32 0.0, %v451
    %453 = vmatmul.f32.gmra.mxu0 %v207
    %v454 = vpop.f32.mrf.mxu0
    %v455 = vadd.f32 0.0, %v454
    %456 = vmatmul.f32.gmra.mxu0 %v210
    %v457 = vpop.f32.mrf.mxu0
    %v458 = vadd.f32 0.0, %v457
    %459 = vdwg.mxu0
    %460 = vmatpush.msra.mxu0 0.0
    %461 = vmatpush.msra.mxu0 0.0
    %462 = vmatpush.msra.mxu0 0.0
    %463 = vmatpush.msra.mxu0 0.0
    %464 = vmatpush.msra.mxu0 0.0
    %465 = vmatpush.msra.mxu0 0.0
    %466 = vmatpush.msra.mxu0 0.0
    %467 = vmatpush.msra.mxu0 0.0
    %468 = vmatpush.msra.mxu0 0.0
    %469 = vmatpush.msra.mxu0 0.0
    %470 = vmatpush.msra.mxu0 0.0
    %471 = vmatpush.msra.mxu0 %v163
    %472 = vmatpush.msra.mxu0 %v156
    %473 = vmatpush.msra.mxu0 %v149
    %474 = vmatpush.msra.mxu0 %v142
    %475 = vmatpush.msra.mxu0 %v135
    %476 = vmatmul.f32.gmra.mxu0 %v168
    %v477 = vpop.f32.mrf.mxu0
    %v478 = vadd.f32 0.0, %v477
    %479 = vmatmul.f32.gmra.mxu0 %v171
    %v480 = vpop.f32.mrf.mxu0
    %v481 = vadd.f32 0.0, %v480
    %482 = vmatmul.f32.gmra.mxu0 %v174
    %v483 = vpop.f32.mrf.mxu0
    %v484 = vadd.f32 0.0, %v483
    %485 = vmatmul.f32.gmra.mxu0 %v177
    %v486 = vpop.f32.mrf.mxu0
    %v487 = vadd.f32 0.0, %v486
    %488 = vmatmul.f32.gmra.mxu0 %v180
    %v489 = vpop.f32.mrf.mxu0
    %v490 = vadd.f32 0.0, %v489
    %491 = vmatmul.f32.gmra.mxu0 %v183
    %v492 = vpop.f32.mrf.mxu0
    %v493 = vadd.f32 0.0, %v492
    %494 = vmatmul.f32.gmra.mxu0 %v186
    %v495 = vpop.f32.mrf.mxu0
    %v496 = vadd.f32 0.0, %v495
    %497 = vmatmul.f32.gmra.mxu0 %v189
    %v498 = vpop.f32.mrf.mxu0
    %v499 = vadd.f32 0.0, %v498
    %500 = vmatmul.f32.gmra.mxu0 %v192
    %v501 = vpop.f32.mrf.mxu0
    %v502 = vadd.f32 0.0, %v501
    %503 = vmatmul.f32.gmra.mxu0 %v195
    %v504 = vpop.f32.mrf.mxu0
    %v505 = vadd.f32 0.0, %v504
    %506 = vmatmul.f32.gmra.mxu0 %v198
    %v507 = vpop.f32.mrf.mxu0
    %v508 = vadd.f32 0.0, %v507
    %509 = vmatmul.f32.gmra.mxu0 %v201
    %v510 = vpop.f32.mrf.mxu0
    %v511 = vadd.f32 0.0, %v510
    %512 = vmatmul.f32.gmra.mxu0 %v204
    %v513 = vpop.f32.mrf.mxu0
    %v514 = vadd.f32 0.0, %v513
    %515 = vmatmul.f32.gmra.mxu0 %v207
    %v516 = vpop.f32.mrf.mxu0
    %v517 = vadd.f32 0.0, %v516
    %518 = vmatmul.f32.gmra.mxu0 %v210
    %v519 = vpop.f32.mrf.mxu0
    %v520 = vadd.f32 0.0, %v519
    %521 = vdwg.mxu0
    %522 = vmatpush.msra.mxu0 0.0
    %523 = vmatpush.msra.mxu0 0.0
    %524 = vmatpush.msra.mxu0 0.0
    %525 = vmatpush.msra.mxu0 0.0
    %526 = vmatpush.msra.mxu0 0.0
    %527 = vmatpush.msra.mxu0 0.0
    %528 = vmatpush.msra.mxu0 0.0
    %529 = vmatpush.msra.mxu0 0.0
    %530 = vmatpush.msra.mxu0 0.0
    %531 = vmatpush.msra.mxu0 0.0
    %532 = vmatpush.msra.mxu0 0.0
    %533 = vmatpush.msra.mxu0 %v164
    %534 = vmatpush.msra.mxu0 %v157
    %535 = vmatpush.msra.mxu0 %v150
    %536 = vmatpush.msra.mxu0 %v143
    %537 = vmatpush.msra.mxu0 %v136
    %538 = vmatmul.f32.gmra.mxu0 %v168
    %v539 = vpop.f32.mrf.mxu0
    %v540 = vadd.f32 0.0, %v539
    %541 = vmatmul.f32.gmra.mxu0 %v171
    %v542 = vpop.f32.mrf.mxu0
    %v543 = vadd.f32 0.0, %v542
    %544 = vmatmul.f32.gmra.mxu0 %v174
    %v545 = vpop.f32.mrf.mxu0
    %v546 = vadd.f32 0.0, %v545
    %547 = vmatmul.f32.gmra.mxu0 %v177
    %v548 = vpop.f32.mrf.mxu0
    %v549 = vadd.f32 0.0, %v548
    %550 = vmatmul.f32.gmra.mxu0 %v180
    %v551 = vpop.f32.mrf.mxu0
    %v552 = vadd.f32 0.0, %v551
    %553 = vmatmul.f32.gmra.mxu0 %v183
    %v554 = vpop.f32.mrf.mxu0
    %v555 = vadd.f32 0.0, %v554
    %556 = vmatmul.f32.gmra.mxu0 %v186
    %v557 = vpop.f32.mrf.mxu0
    %v558 = vadd.f32 0.0, %v557
    %559 = vmatmul.f32.gmra.mxu0 %v189
    %v560 = vpop.f32.mrf.mxu0
    %v561 = vadd.f32 0.0, %v560
    %562 = vmatmul.f32.gmra.mxu0 %v192
    %v563 = vpop.f32.mrf.mxu0
    %v564 = vadd.f32 0.0, %v563
    %565 = vmatmul.f32.gmra.mxu0 %v195
    %v566 = vpop.f32.mrf.mxu0
    %v567 = vadd.f32 0.0, %v566
    %568 = vmatmul.f32.gmra.mxu0 %v198
    %v569 = vpop.f32.mrf.mxu0
    %v570 = vadd.f32 0.0, %v569
    %571 = vmatmul.f32.gmra.mxu0 %v201
    %v572 = vpop.f32.mrf.mxu0
    %v573 = vadd.f32 0.0, %v572
    %574 = vmatmul.f32.gmra.mxu0 %v204
    %v575 = vpop.f32.mrf.mxu0
    %v576 = vadd.f32 0.0, %v575
    %577 = vmatmul.f32.gmra.mxu0 %v207
    %v578 = vpop.f32.mrf.mxu0
    %v579 = vadd.f32 0.0, %v578
    %580 = vmatmul.f32.gmra.mxu0 %v210
    %v581 = vpop.f32.mrf.mxu0
    %v582 = vadd.f32 0.0, %v581
    %583 = vdwg.mxu0
    %584 = vmatpush.msra.mxu0 0.0
    %585 = vmatpush.msra.mxu0 0.0
    %586 = vmatpush.msra.mxu0 0.0
    %587 = vmatpush.msra.mxu0 0.0
    %588 = vmatpush.msra.mxu0 0.0
    %589 = vmatpush.msra.mxu0 0.0
    %590 = vmatpush.msra.mxu0 0.0
    %591 = vmatpush.msra.mxu0 0.0
    %592 = vmatpush.msra.mxu0 0.0
    %593 = vmatpush.msra.mxu0 0.0
    %594 = vmatpush.msra.mxu0 0.0
    %595 = vmatpush.msra.mxu0 %v165
    %596 = vmatpush.msra.mxu0 %v158
    %597 = vmatpush.msra.mxu0 %v151
    %598 = vmatpush.msra.mxu0 %v144
    %599 = vmatpush.msra.mxu0 %v137
    %600 = vmatmul.f32.gmra.mxu0 %v168
    %v601 = vpop.f32.mrf.mxu0
    %v602 = vadd.f32 0.0, %v601
    %603 = vmatmul.f32.gmra.mxu0 %v171
    %v604 = vpop.f32.mrf.mxu0
    %v605 = vadd.f32 0.0, %v604
    %606 = vmatmul.f32.gmra.mxu0 %v174
    %v607 = vpop.f32.mrf.mxu0
    %v608 = vadd.f32 0.0, %v607
    %609 = vmatmul.f32.gmra.mxu0 %v177
    %v610 = vpop.f32.mrf.mxu0
    %v611 = vadd.f32 0.0, %v610
    %612 = vmatmul.f32.gmra.mxu0 %v180
    %v613 = vpop.f32.mrf.mxu0
    %v614 = vadd.f32 0.0, %v613
    %615 = vmatmul.f32.gmra.mxu0 %v183
    %v616 = vpop.f32.mrf.mxu0
    %v617 = vadd.f32 0.0, %v616
    %618 = vmatmul.f32.gmra.mxu0 %v186
    %v619 = vpop.f32.mrf.mxu0
    %v620 = vadd.f32 0.0, %v619
    %621 = vmatmul.f32.gmra.mxu0 %v189
    %v622 = vpop.f32.mrf.mxu0
    %v623 = vadd.f32 0.0, %v622
    %624 = vmatmul.f32.gmra.mxu0 %v192
    %v625 = vpop.f32.mrf.mxu0
    %v626 = vadd.f32 0.0, %v625
    %627 = vmatmul.f32.gmra.mxu0 %v195
    %v628 = vpop.f32.mrf.mxu0
    %v629 = vadd.f32 0.0, %v628
    %630 = vmatmul.f32.gmra.mxu0 %v198
    %v631 = vpop.f32.mrf.mxu0
    %v632 = vadd.f32 0.0, %v631
    %633 = vmatmul.f32.gmra.mxu0 %v201
    %v634 = vpop.f32.mrf.mxu0
    %v635 = vadd.f32 0.0, %v634
    %636 = vmatmul.f32.gmra.mxu0 %v204
    %v637 = vpop.f32.mrf.mxu0
    %v638 = vadd.f32 0.0, %v637
    %639 = vmatmul.f32.gmra.mxu0 %v207
    %v640 = vpop.f32.mrf.mxu0
    %v641 = vadd.f32 0.0, %v640
    %642 = vmatmul.f32.gmra.mxu0 %v210
    %v643 = vpop.f32.mrf.mxu0
    %v644 = vadd.f32 0.0, %v643
    %645 = vdwg.mxu0
    %646 = vst [vmem:[%s3] sm:$0xff] %v230
    %647 = vst [vmem:[%s3 + $0x8] sm:$0xff] %v292
    %648 = vst [vmem:[%s3 + $0x10] sm:$0xff] %v354
    %649 = vst [vmem:[%s3 + $0x18] sm:$0xff] %v416
    %650 = vst [vmem:[%s3 + $0x20] sm:$0xff] %v478
    %651 = vst [vmem:[%s3 + $0x28] sm:$0xff] %v540
    %vm652 = vcmask 130048
    %653 = vst.msk [vmem:[%s3 + $0x30] sm:$0xff] %vm652, %v602
    %654 = vst [vmem:[%s3 + $0x38] sm:$0xff] %v233
    %655 = vst [vmem:[%s3 + $0x40] sm:$0xff] %v295
    %656 = vst [vmem:[%s3 + $0x48] sm:$0xff] %v357
    %657 = vst [vmem:[%s3 + $0x50] sm:$0xff] %v419
    %658 = vst [vmem:[%s3 + $0x58] sm:$0xff] %v481
    %659 = vst [vmem:[%s3 + $0x60] sm:$0xff] %v543
    %660 = vst.msk [vmem:[%s3 + $0x68] sm:$0xff] %vm652, %v605
    %661 = vst [vmem:[%s3 + $0x70] sm:$0xff] %v236
    %662 = vst [vmem:[%s3 + $0x78] sm:$0xff] %v298
    %663 = vst [vmem:[%s3 + $0x80] sm:$0xff] %v360
    %664 = vst [vmem:[%s3 + $0x88] sm:$0xff] %v422
    %665 = vst [vmem:[%s3 + $0x90] sm:$0xff] %v484
    %666 = vst [vmem:[%s3 + $0x98] sm:$0xff] %v546
    %667 = vst.msk [vmem:[%s3 + $0xa0] sm:$0xff] %vm652, %v608
    %668 = vst [vmem:[%s3 + $0xa8] sm:$0xff] %v239
    %669 = vst [vmem:[%s3 + $0xb0] sm:$0xff] %v301
    %670 = vst [vmem:[%s3 + $0xb8] sm:$0xff] %v363
    %671 = vst [vmem:[%s3 + $0xc0] sm:$0xff] %v425
    %672 = vst [vmem:[%s3 + $0xc8] sm:$0xff] %v487
    %673 = vst [vmem:[%s3 + $0xd0] sm:$0xff] %v549
    %674 = vst.msk [vmem:[%s3 + $0xd8] sm:$0xff] %vm652, %v611
    %675 = vst [vmem:[%s3 + $0xe0] sm:$0xff] %v242
    %676 = vst [vmem:[%s3 + $0xe8] sm:$0xff] %v304
    %677 = vst [vmem:[%s3 + $0xf0] sm:$0xff] %v366
    %678 = vst [vmem:[%s3 + $0xf8] sm:$0xff] %v428
    %679 = vst [vmem:[%s3 + $0x100] sm:$0xff] %v490
    %680 = vst [vmem:[%s3 + $0x108] sm:$0xff] %v552
    %681 = vst.msk [vmem:[%s3 + $0x110] sm:$0xff] %vm652, %v614
    %682 = vst [vmem:[%s3 + $0x118] sm:$0xff] %v245
    %683 = vst [vmem:[%s3 + $0x120] sm:$0xff] %v307
    %684 = vst [vmem:[%s3 + $0x128] sm:$0xff] %v369
    %685 = vst [vmem:[%s3 + $0x130] sm:$0xff] %v431
    %686 = vst [vmem:[%s3 + $0x138] sm:$0xff] %v493
    %687 = vst [vmem:[%s3 + $0x140] sm:$0xff] %v555
    %688 = vst.msk [vmem:[%s3 + $0x148] sm:$0xff] %vm652, %v617
    %689 = vst [vmem:[%s3 + $0x150] sm:$0xff] %v248
    %690 = vst [vmem:[%s3 + $0x158] sm:$0xff] %v310
    %691 = vst [vmem:[%s3 + $0x160] sm:$0xff] %v372
    %692 = vst [vmem:[%s3 + $0x168] sm:$0xff] %v434
    %693 = vst [vmem:[%s3 + $0x170] sm:$0xff] %v496
    %694 = vst [vmem:[%s3 + $0x178] sm:$0xff] %v558
    %695 = vst.msk [vmem:[%s3 + $0x180] sm:$0xff] %vm652, %v620
    %696 = vst [vmem:[%s3 + $0x188] sm:$0xff] %v251
    %697 = vst [vmem:[%s3 + $0x190] sm:$0xff] %v313
    %698 = vst [vmem:[%s3 + $0x198] sm:$0xff] %v375
    %699 = vst [vmem:[%s3 + $0x1a0] sm:$0xff] %v437
    %700 = vst [vmem:[%s3 + $0x1a8] sm:$0xff] %v499
    %701 = vst [vmem:[%s3 + $0x1b0] sm:$0xff] %v561
    %702 = vst.msk [vmem:[%s3 + $0x1b8] sm:$0xff] %vm652, %v623
    %703 = vst [vmem:[%s3 + $0x1c0] sm:$0xff] %v254
    %704 = vst [vmem:[%s3 + $0x1c8] sm:$0xff] %v316
    %705 = vst [vmem:[%s3 + $0x1d0] sm:$0xff] %v378
    %706 = vst [vmem:[%s3 + $0x1d8] sm:$0xff] %v440
    %707 = vst [vmem:[%s3 + $0x1e0] sm:$0xff] %v502
    %708 = vst [vmem:[%s3 + $0x1e8] sm:$0xff] %v564
    %709 = vst.msk [vmem:[%s3 + $0x1f0] sm:$0xff] %vm652, %v626
    %710 = vst [vmem:[%s3 + $0x1f8] sm:$0xff] %v257
    %711 = vst [vmem:[%s3 + $0x200] sm:$0xff] %v319
    %712 = vst [vmem:[%s3 + $0x208] sm:$0xff] %v381
    %713 = vst [vmem:[%s3 + $0x210] sm:$0xff] %v443
    %714 = vst [vmem:[%s3 + $0x218] sm:$0xff] %v505
    %715 = vst [vmem:[%s3 + $0x220] sm:$0xff] %v567
    %716 = vst.msk [vmem:[%s3 + $0x228] sm:$0xff] %vm652, %v629
    %717 = vst [vmem:[%s3 + $0x230] sm:$0xff] %v260
    %718 = vst [vmem:[%s3 + $0x238] sm:$0xff] %v322
    %719 = vst [vmem:[%s3 + $0x240] sm:$0xff] %v384
    %720 = vst [vmem:[%s3 + $0x248] sm:$0xff] %v446
    %721 = vst [vmem:[%s3 + $0x250] sm:$0xff] %v508
    %722 = vst [vmem:[%s3 + $0x258] sm:$0xff] %v570
    %723 = vst.msk [vmem:[%s3 + $0x260] sm:$0xff] %vm652, %v632
    %724 = vst [vmem:[%s3 + $0x268] sm:$0xff] %v263
    %725 = vst [vmem:[%s3 + $0x270] sm:$0xff] %v325
    %726 = vst [vmem:[%s3 + $0x278] sm:$0xff] %v387
    %727 = vst [vmem:[%s3 + $0x280] sm:$0xff] %v449
    %728 = vst [vmem:[%s3 + $0x288] sm:$0xff] %v511
    %729 = vst [vmem:[%s3 + $0x290] sm:$0xff] %v573
    %730 = vst.msk [vmem:[%s3 + $0x298] sm:$0xff] %vm652, %v635
    %731 = vst [vmem:[%s3 + $0x2a0] sm:$0xff] %v266
    %732 = vst [vmem:[%s3 + $0x2a8] sm:$0xff] %v328
    %733 = vst [vmem:[%s3 + $0x2b0] sm:$0xff] %v390
    %734 = vst [vmem:[%s3 + $0x2b8] sm:$0xff] %v452
    %735 = vst [vmem:[%s3 + $0x2c0] sm:$0xff] %v514
    %736 = vst [vmem:[%s3 + $0x2c8] sm:$0xff] %v576
    %737 = vst.msk [vmem:[%s3 + $0x2d0] sm:$0xff] %vm652, %v638
    %738 = vst [vmem:[%s3 + $0x2d8] sm:$0xff] %v269
    %739 = vst [vmem:[%s3 + $0x2e0] sm:$0xff] %v331
    %740 = vst [vmem:[%s3 + $0x2e8] sm:$0xff] %v393
    %741 = vst [vmem:[%s3 + $0x2f0] sm:$0xff] %v455
    %742 = vst [vmem:[%s3 + $0x2f8] sm:$0xff] %v517
    %743 = vst [vmem:[%s3 + $0x300] sm:$0xff] %v579
    %744 = vst.msk [vmem:[%s3 + $0x308] sm:$0xff] %vm652, %v641
    %745 = vst [vmem:[%s3 + $0x310] sm:$0xff] %v272
    %746 = vst [vmem:[%s3 + $0x318] sm:$0xff] %v334
    %747 = vst [vmem:[%s3 + $0x320] sm:$0xff] %v396
    %748 = vst [vmem:[%s3 + $0x328] sm:$0xff] %v458
    %749 = vst [vmem:[%s3 + $0x330] sm:$0xff] %v520
    %750 = vst [vmem:[%s3 + $0x338] sm:$0xff] %v582
    %751 = vst.msk [vmem:[%s3 + $0x340] sm:$0xff] %vm652, %v644
    // Predicated region
    $region22: #{tpu_custom_call.1} parent=1 // pred_check
      _
    $region23: #{tpu_custom_call.1} parent=1 // pred_check_branch
      %753 = sbr.rel (0) target = $region25
    $region24: #{tpu_custom_call.1} parent=1 // pred_region
      _
    $region25: #{tpu_custom_call.1} parent=1 // pred_fallthru
      _
    // Predicated region
    $region26: #{tpu_custom_call.1} parent=1 // pred_check
      _
    $region27: #{tpu_custom_call.1} parent=1 // pred_check_branch
      %755 = sbr.rel (0) target = $region29
    $region28: #{tpu_custom_call.1} parent=1 // pred_region
      _
    $region29: #{tpu_custom_call.1} parent=1 // pred_fallthru
      _
    %756 = vsyncpa [#allocation3], 1
    %757 = vsyncpa [#allocation5], 1

</llo_original>
